<compile_context>
chip_gen: v7x
topology: tpu7x:2x2x1
jax: 0.10.0
libtpu: 0.0.40
codegen_flags: <defaults>
</compile_context>

<pallas_src>
import functools

import jax
import jax.numpy as jnp
from jax.experimental import pallas as pl
from jax.experimental.pallas import tpu as pltpu


AUG_NAMES = [
    'AutoContrast', 'Brightness', 'Color', 'Contrast', 'Cutout', 'Equalize',
    'Invert', 'Identity', 'Posterize', 'Rescale', 'Rotate', 'Sharpness',
    'ShearX', 'ShearY', 'Smooth', 'Solarize', 'TranslateX', 'TranslateY',
]

_CUTOUT_ID = AUG_NAMES.index('Cutout')
_RESCALE_ID = AUG_NAMES.index('Rescale')

_GRAY = (0.2989, 0.587, 0.114)   # torchvision rgb_to_grayscale coefficients


def augmentation_space(num_bins):
    return {
        'AutoContrast': jnp.linspace(0.0, 1.0, num_bins),
        'Brightness': jnp.linspace(0.0, 1.0, num_bins),
        'Color': jnp.linspace(0.0, 1.0, num_bins),
        'Contrast': jnp.linspace(0.0, 1.0, num_bins),
        'Cutout': jnp.linspace(0.0, 0.5, num_bins),
        'Equalize': jnp.linspace(0.0, 1.0, num_bins),
        'Invert': jnp.linspace(0.0, 1.0, num_bins),
        'Identity': jnp.linspace(0.0, 1.0, num_bins),
        'Posterize': jnp.linspace(0.0, 8.0, num_bins),
        'Rescale': jnp.linspace(0.5, 1.0, num_bins),
        'Rotate': jnp.linspace(-45.0, 45.0, num_bins),
        'Sharpness': jnp.linspace(0.0, 1.0, num_bins),
        'ShearX': jnp.linspace(-0.3, 0.3, num_bins),
        'ShearY': jnp.linspace(-0.3, 0.3, num_bins),
        'Smooth': jnp.linspace(0.0, 1.0, num_bins),
        'Solarize': jnp.linspace(0.0, 1.0, num_bins),
        'TranslateX': jnp.linspace(-0.3, 0.3, num_bins),
        'TranslateY': jnp.linspace(-0.3, 0.3, num_bins),
    }


# --------------------------------------------------------------------------
# Fused Pallas kernel: one grid step == one image of the batch.
#   iparams (scalar-prefetch SMEM, int32,  B*depth*4): [op_id, cut_y0, cut_x0, patch]
#   fparams (SMEM, float32, B*depth*3): [magnitude, post_levels, post_inv_levels]
#   img_ref / out_ref (VMEM): (C, H*W) lane-dense per-image block.
# --------------------------------------------------------------------------
def _ctaug_kernel(depth, C, H, W, iparams_ref, fparams_ref, img_ref, out_ref):
    HW = H * W
    b = pl.program_id(0)
    ibase = b * (depth * 4)
    fbase = b * (depth * 3)

    x = img_ref[...].astype(jnp.float32)                       # (C, HW)

    # Hoisted index helpers, built once at (1, HW) and broadcast on use.
    lin = jax.lax.broadcasted_iota(jnp.int32, (1, HW), 1)
    if (W & (W - 1)) == 0:                                     # power-of-two fast path
        row = lin >> (W.bit_length() - 1)
        col = lin & (W - 1)
    else:
        row = lin // W
        col = lin - row * W
    col_lo = col > 0
    col_hi = col < W - 1
    row_lo = row > 0
    row_hi = row < H - 1
    interior = row_lo & row_hi & col_lo & col_hi

    # Cutout fill decision hoisted: Cutout only ever writes 0.5 / 0.0, so the
    # img.min() >= 0 test of the reference never changes after the first step.
    fill = jnp.where(jnp.min(x, keepdims=True) >= 0.0, 0.5, 0.0)   # (1, 1)

    def cutout(state, y0, x0, ps):
        inside = ((row >= y0) & (row < y0 + ps) &
                  (col >= x0) & (col < x0 + ps))                # (1, HW)
        return jnp.where(inside, fill, state)

    def apply_last(state, op_id, mag, levels, inv_levels, y0, x0, ps):
        om = 1.0 - mag

        # rgb_to_grayscale (shared by Color / Contrast)
        if C == 3:
            gray = (_GRAY[0] * state[0:1] + _GRAY[1] * state[1:2]
                    + _GRAY[2] * state[2:3])                    # (1, HW)
        else:
            # TODO(synk): grayscale is only defined for RGB; use channel mean.
            gray = jnp.mean(state, axis=0, keepdims=True)

        # AutoContrast, blended: img_t*mag + img*(1-mag)
        mn = jnp.min(state, axis=1, keepdims=True)
        mx = jnp.max(state, axis=1, keepdims=True)
        degen = mn == mx
        lo = jnp.where(degen, 0.0, mn)
        denom = jnp.maximum(jnp.where(degen, 1.0, mx - mn), 1e-12)
        scale = pl.reciprocal(denom, approx=True)               # EUP slot
        ac = jnp.clip((state - lo) * scale, 0.0, 1.0)
        r_autocontrast = ac * mag + state * om

        # Simple pointwise ops
        r_brightness = jnp.clip(state * mag, 0.0, 1.0)
        r_color = jnp.clip(mag * state + om * gray, 0.0, 1.0)
        gmean = jnp.mean(gray, keepdims=True)                   # (1, 1)
        r_contrast = jnp.clip(mag * state + om * gmean, 0.0, 1.0)
        r_invert = (1.0 - state) * mag + state * om
        r_solarize = jnp.where(state >= mag, 1.0 - state, state)
        # TODO(synk): float floor-quantization approximation of uint8 bit-mask posterize.
        r_posterize = jnp.clip(jnp.floor(state * levels) * inv_levels, 0.0, 1.0)
        r_cutout = cutout(state, y0, x0, ps)

        # 3x3 [[1,1,1],[1,5,1],[1,1,1]] conv (zero padded) via XLU rolls + VPU
        # adds on the flat (C, H*W) layout -- no MXU matmuls.
        left = jnp.where(col_lo, pltpu.roll(state, 1, axis=1), 0.0)        # x[r, c-1]
        right = jnp.where(col_hi, pltpu.roll(state, HW - 1, axis=1), 0.0)  # x[r, c+1]
        csum = state + left + right
        up = jnp.where(row_lo, pltpu.roll(csum, W, axis=1), 0.0)           # csum[r-1, c]
        down = jnp.where(row_hi, pltpu.roll(csum, HW - W, axis=1), 0.0)    # csum[r+1, c]
        conv = csum + up + down + 4.0 * state
        blurred = jnp.clip(conv * (1.0 / 13.0), 0.0, 1.0)
        # TODO(synk): reference blends the UN-normalized conv (weights sum to 13);
        # we blend the normalized blur so the result stays in the image range.
        r_smooth = blurred * mag + state * om
        r_sharpness = jnp.clip(
            mag * state + om * jnp.where(interior, blurred, state), 0.0, 1.0)

        # Runtime dispatch: one vselect per branch (bit-exact, no FP blend).
        # TODO(synk): Equalize / Rescale / Rotate / ShearX / ShearY have no clean
        # Pallas equivalent and fall back to identity; TranslateX/Y round to 0 px
        # for this magnitude space (identity affine).
        branches = (
            (AUG_NAMES.index('AutoContrast'), r_autocontrast),
            (AUG_NAMES.index('Brightness'), r_brightness),
            (AUG_NAMES.index('Color'), r_color),
            (AUG_NAMES.index('Contrast'), r_contrast),
            (_CUTOUT_ID, r_cutout),
            (AUG_NAMES.index('Invert'), r_invert),
            (AUG_NAMES.index('Posterize'), r_posterize),
            (AUG_NAMES.index('Sharpness'), r_sharpness),
            (AUG_NAMES.index('Smooth'), r_smooth),
            (AUG_NAMES.index('Solarize'), r_solarize),
        )
        res = state
        for bid, br in branches:
            res = jnp.where(op_id == bid, br, res)
        return res

    # Emulate the torch forward: every sampled op is applied to the ORIGINAL
    # image; only Cutout mutates it in place, so among the non-final steps only
    # Cutout can affect the final result.
    state = x
    for d in range(depth - 1):
        op_id = iparams_ref[ibase + 4 * d + 0]
        y0 = iparams_ref[ibase + 4 * d + 1]
        x0 = iparams_ref[ibase + 4 * d + 2]
        ps = iparams_ref[ibase + 4 * d + 3]
        state = jnp.where(op_id == _CUTOUT_ID, cutout(state, y0, x0, ps), state)

    d = depth - 1
    out = apply_last(
        state,
        iparams_ref[ibase + 4 * d + 0],
        fparams_ref[fbase + 3 * d + 0],
        fparams_ref[fbase + 3 * d + 1],
        fparams_ref[fbase + 3 * d + 2],
        iparams_ref[ibase + 4 * d + 1],
        iparams_ref[ibase + 4 * d + 2],
        iparams_ref[ibase + 4 * d + 3],
    )
    out_ref[...] = out.astype(out_ref.dtype)


# --------------------------------------------------------------------------
# Device-side sampling + fused batched augmentation (one jit, one pallas_call).
# --------------------------------------------------------------------------
def _forward_impl(key, bins, mag_table, imgs, *, depth, th, num_augs):
    B, C, H, W = imgs.shape
    HW = H * W
    k_aug, k_bin, k_x, k_y, k_r = jax.random.split(key, 5)

    # Per-image, per-step op sampling (vectorized; stays on device).
    aug_idx = jax.random.randint(k_aug, (B, depth), 0, num_augs)        # (B, depth)
    probs = bins[aug_idx]                                               # (B, depth, bins)
    probs = jnp.where(probs <= th, 1e-6, probs)
    bin_idx = jax.random.categorical(k_bin, jnp.log(probs), axis=-1)    # (B, depth)
    mag = mag_table[aug_idx, bin_idx].astype(jnp.float32)               # (B, depth)

    # Cutout geometry (only consumed when the sampled op is Cutout).
    patch = jnp.round(W * mag).astype(jnp.int32)
    hi_x = jnp.maximum(W - patch, 1).astype(jnp.float32)
    hi_y = jnp.maximum(H - patch, 1).astype(jnp.float32)
    x0 = jnp.floor(jax.random.uniform(k_x, (B, depth)) * hi_x).astype(jnp.int32)
    y0 = jnp.floor(jax.random.uniform(k_y, (B, depth)) * hi_y).astype(jnp.int32)

    # Rescale interpolation choice (recorded only when the op is Rescale).
    resc_idx = jax.random.randint(k_r, (B, depth), 0, 6)

    # Posterize quantization levels (2**round(mag)), computed on device.
    bits = jnp.round(mag)
    levels = jnp.exp2(bits).astype(jnp.float32)
    inv_levels = jnp.exp2(-bits).astype(jnp.float32)

    # Flat 1-D scalar tables (1-D SMEM only pads to next pow2; no 2-D padding).
    iparams = jnp.stack([aug_idx.astype(jnp.int32), y0, x0, patch],
                        axis=-1).reshape(-1)                            # (B*depth*4,)
    fparams = jnp.stack([mag, levels, inv_levels],
                        axis=-1).astype(jnp.float32).reshape(-1)        # (B*depth*3,)

    # Lane-dense layout: (B, C, H, W) -> (B, C, H*W); dtype cast happens in-kernel.
    img_flat = imgs.reshape(B, C, HW)

    out_flat = pl.pallas_call(
        functools.partial(_ctaug_kernel, depth, C, H, W),
        out_shape=jax.ShapeDtypeStruct((B, C, HW), imgs.dtype),
        grid_spec=pltpu.PrefetchScalarGridSpec(
            num_scalar_prefetch=1,                               # iparams -> SMEM
            grid=(B,),
            in_specs=[
                pl.BlockSpec(memory_space=pltpu.MemorySpace.SMEM),   # fparams (f32 table)
                pl.BlockSpec((None, C, HW), lambda b, ip: (b, 0, 0)),  # one image / step
            ],
            out_specs=pl.BlockSpec((None, C, HW), lambda b, ip: (b, 0, 0)),
        ),
        compiler_params=pltpu.CompilerParams(
            dimension_semantics=("parallel",)),                  # v7x: use both TCs
    )(iparams, fparams, img_flat)

    out = out_flat.reshape(B, C, H, W)
    return out, aug_idx, bin_idx, resc_idx


# --------------------------------------------------------------------------
# Batched bins update: one jitted dispatch per update() call.
# --------------------------------------------------------------------------
def _update_impl(bins, rescale_bins, aug_idx, bin_idx, is_resc, resc_idx, w, *, decay):
    def body(i, carry):
        bins, rbins = carry
        ai = aug_idx[i]
        bi = bin_idx[i]
        bins = bins.at[ai, bi].set(decay * bins[ai, bi] + (1.0 - decay) * w)
        ri = resc_idx[i]
        new_r = decay * rbins[ri] + (1.0 - decay) * w
        rbins = rbins.at[ri].set(jnp.where(is_resc[i], new_r, rbins[ri]))
        return bins, rbins
    return jax.lax.fori_loop(0, aug_idx.shape[0], body, (bins, rescale_bins))


# --------------------------------------------------------------------------
# CTAugment (JAX / Pallas version of the nn.Module)
# --------------------------------------------------------------------------
class CTAugment:
    def __init__(self, depth=2, th=0.85, decay=0.99, num_bins=17,
                 img_size=(16, 16), seed=0):
        self.depth = depth
        self.th = th
        self.decay = decay
        self.num_bins = num_bins
        self.img_size = img_size
        self.op_meta = augmentation_space(num_bins)
        self.num_augs = len(self.op_meta)
        self.mag_table = jnp.stack(
            [self.op_meta[k] for k in AUG_NAMES]).astype(jnp.float32)
        self.bins = jnp.ones((self.num_augs, num_bins), jnp.float32)
        self.rescale_bins = jnp.ones((6,), jnp.float32)
        # Stacked per-forward device index arrays (no per-element dispatches).
        self._aug_idx = []
        self._bin_idx = []
        self._resc_idx = []
        self._key = jax.random.PRNGKey(seed)
        self._forward_fn = jax.jit(functools.partial(
            _forward_impl, depth=self.depth, th=self.th, num_augs=self.num_augs))
        self._update_fn = jax.jit(functools.partial(_update_impl, decay=self.decay))

    def _next_key(self):
        self._key, k = jax.random.split(self._key)
        return k

    def update(self, preds, labels):
        if not self._aug_idx:
            return
        w = 1.0 - 1.0 / (2 * labels.shape[0]) * jnp.abs(preds - labels).sum()
        aug_idx = jnp.concatenate(self._aug_idx)
        bin_idx = jnp.concatenate(self._bin_idx)
        resc_idx = jnp.concatenate(self._resc_idx)
        is_resc = aug_idx == _RESCALE_ID
        self.bins, self.rescale_bins = self._update_fn(
            self.bins, self.rescale_bins, aug_idx, bin_idx, is_resc, resc_idx, w)
        self._aug_idx, self._bin_idx, self._resc_idx = [], [], []

    def forward(self, img):
        # Accepts a single (C, H, W) image (reference semantics) or a batch
        # (B, C, H, W); each image gets its own independently sampled op chain.
        single = img.ndim == 3
        imgs = img[None] if single else img
        out, aug_idx, bin_idx, resc_idx = self._forward_fn(
            self._next_key(), self.bins, self.mag_table, imgs)
        self._aug_idx.append(aug_idx.reshape(-1))
        self._bin_idx.append(bin_idx.reshape(-1))
        self._resc_idx.append(resc_idx.reshape(-1))
        return out[0] if single else out

    __call__ = forward


if __name__ == "__main__":
    key = jax.random.PRNGKey(0)
    # small batch of CHW images
    imgs = jax.random.uniform(key, (8, 3, 16, 16), dtype=jnp.float32)

    ct = CTAugment(depth=2, th=0.85, decay=0.99, num_bins=17,
                   img_size=(16, 16), seed=0)

    out = jax.block_until_ready(ct(imgs))           # batched forward, one pallas_call
    assert out.shape == imgs.shape and out.dtype == imgs.dtype
    assert bool(jnp.all(jnp.isfinite(out)))

    out1 = jax.block_until_ready(ct(imgs[0]))       # single-image path still works
    assert out1.shape == imgs[0].shape and out1.dtype == imgs.dtype
    assert bool(jnp.all(jnp.isfinite(out1)))

    preds = jax.random.uniform(jax.random.PRNGKey(1), (4,))
    labels = jnp.zeros((4,), jnp.float32)
    ct.update(preds, labels)                        # single fused device-side update
    jax.block_until_ready(ct.bins)
    assert bool(jnp.all(jnp.isfinite(ct.bins)))
    assert bool(jnp.all(jnp.isfinite(ct.rescale_bins)))

    print("KERNEL_OK")
</pallas_src>

<mosaic_0001>
module attributes {stable_mosaic.version = 11 : i64} {
  func.func @_ctaug_kernel(%arg0: i32, %arg1: memref<64xi32, #tpu.memory_space<smem>>, %arg2: memref<48xf32, #tpu.memory_space<smem>>, %arg3: memref<1x3x256xf32, #tpu.memory_space<vmem>>, %arg4: memref<1x3x256xf32, #tpu.memory_space<vmem>>) attributes {dimension_semantics = [#tpu.dimension_semantics<parallel>], iteration_bounds = array<i64: 8>, scalar_prefetch = 1 : i64, scratch_operands = 0 : i64, tpu.core_type = #tpu.core_type<tc>, window_params = [{transform_indices = @transform_0, window_bounds = array<i64: 48>}, {transform_indices = @transform_1, window_bounds = array<i64: 1, 3, 256>}, {transform_indices = @transform_2, window_bounds = array<i64: 1, 3, 256>}]} {
    %c8_i32 = arith.constant 8 : i32
    %0 = arith.muli %arg0, %c8_i32 : i32
    %c6_i32 = arith.constant 6 : i32
    %1 = arith.muli %arg0, %c6_i32 : i32
    %c0 = arith.constant 0 : index
    %c0_0 = arith.constant 0 : index
    %c0_1 = arith.constant 0 : index
    %2 = vector.load %arg3[%c0, %c0_0, %c0_1] : memref<1x3x256xf32, #tpu.memory_space<vmem>>, vector<1x3x256xf32>
    %3 = vector.shape_cast %2 : vector<1x3x256xf32> to vector<3x256xf32>
    %4 = tpu.iota {dimensions = array<i32: 1>} : vector<1x256xi32>
    %c4_i32 = arith.constant 4 : i32
    %5 = vector.broadcast %c4_i32 : i32 to vector<1x256xi32>
    %6 = arith.shrsi %4, %5 : vector<1x256xi32>
    %c15_i32 = arith.constant 15 : i32
    %7 = vector.broadcast %c15_i32 : i32 to vector<1x256xi32>
    %8 = arith.andi %4, %7 : vector<1x256xi32>
    %c0_i32 = arith.constant 0 : i32
    %9 = vector.broadcast %c0_i32 : i32 to vector<1x256xi32>
    %10 = arith.cmpi sgt, %8, %9 : vector<1x256xi32>
    %c15_i32_2 = arith.constant 15 : i32
    %11 = vector.broadcast %c15_i32_2 : i32 to vector<1x256xi32>
    %12 = arith.cmpi slt, %8, %11 : vector<1x256xi32>
    %c0_i32_3 = arith.constant 0 : i32
    %13 = vector.broadcast %c0_i32_3 : i32 to vector<1x256xi32>
    %14 = arith.cmpi sgt, %6, %13 : vector<1x256xi32>
    %c15_i32_4 = arith.constant 15 : i32
    %15 = vector.broadcast %c15_i32_4 : i32 to vector<1x256xi32>
    %16 = arith.cmpi slt, %6, %15 : vector<1x256xi32>
    %17 = arith.andi %14, %16 : vector<1x256xi1>
    %18 = arith.andi %17, %10 : vector<1x256xi1>
    %19 = arith.andi %18, %12 : vector<1x256xi1>
    %20 = vector.shape_cast %3 : vector<3x256xf32> to vector<1x3x256xf32>
    %cst = arith.constant dense<0x7F800000> : vector<1xf32>
    %21 = vector.multi_reduction <minimumf>, %20, %cst [1, 2] : vector<1x3x256xf32> to vector<1xf32>
    %22 = vector.shape_cast %21 : vector<1xf32> to vector<1x1x1xf32>
    %23 = vector.extract %22[0, 0, 0] : f32 from vector<1x1x1xf32>
    %24 = vector.broadcast %23 : f32 to vector<1x1xf32>
    %cst_5 = arith.constant 0.000000e+00 : f32
    %25 = vector.broadcast %cst_5 : f32 to vector<1x1xf32>
    %26 = arith.cmpf oge, %24, %25 : vector<1x1xf32>
    %cst_6 = arith.constant 5.000000e-01 : f32
    %cst_7 = arith.constant 0.000000e+00 : f32
    %27 = vector.broadcast %cst_6 : f32 to vector<1x1xf32>
    %28 = vector.broadcast %cst_7 : f32 to vector<1x1xf32>
    %29 = arith.select %26, %27, %28 : vector<1x1xi1>, vector<1x1xf32>
    %c0_i32_8 = arith.constant 0 : i32
    %30 = arith.addi %0, %c0_i32_8 : i32
    %c0_i32_9 = arith.constant 0 : i32
    %31 = arith.addi %30, %c0_i32_9 : i32
    %32 = arith.index_cast %31 : i32 to index
    %33 = memref.load %arg1[%32] : memref<64xi32, #tpu.memory_space<smem>>
    %c0_i32_10 = arith.constant 0 : i32
    %34 = arith.addi %0, %c0_i32_10 : i32
    %c1_i32 = arith.constant 1 : i32
    %35 = arith.addi %34, %c1_i32 : i32
    %36 = arith.index_cast %35 : i32 to index
    %37 = memref.load %arg1[%36] : memref<64xi32, #tpu.memory_space<smem>>
    %c0_i32_11 = arith.constant 0 : i32
    %38 = arith.addi %0, %c0_i32_11 : i32
    %c2_i32 = arith.constant 2 : i32
    %39 = arith.addi %38, %c2_i32 : i32
    %40 = arith.index_cast %39 : i32 to index
    %41 = memref.load %arg1[%40] : memref<64xi32, #tpu.memory_space<smem>>
    %c0_i32_12 = arith.constant 0 : i32
    %42 = arith.addi %0, %c0_i32_12 : i32
    %c3_i32 = arith.constant 3 : i32
    %43 = arith.addi %42, %c3_i32 : i32
    %44 = arith.index_cast %43 : i32 to index
    %45 = memref.load %arg1[%44] : memref<64xi32, #tpu.memory_space<smem>>
    %c4_i32_13 = arith.constant 4 : i32
    %46 = arith.cmpi eq, %33, %c4_i32_13 : i32
    %47 = vector.broadcast %37 : i32 to vector<1x256xi32>
    %48 = arith.cmpi sge, %6, %47 : vector<1x256xi32>
    %49 = arith.addi %37, %45 : i32
    %50 = vector.broadcast %49 : i32 to vector<1x256xi32>
    %51 = arith.cmpi slt, %6, %50 : vector<1x256xi32>
    %52 = arith.andi %48, %51 : vector<1x256xi1>
    %53 = vector.broadcast %41 : i32 to vector<1x256xi32>
    %54 = arith.cmpi sge, %8, %53 : vector<1x256xi32>
    %55 = arith.andi %52, %54 : vector<1x256xi1>
    %56 = arith.addi %41, %45 : i32
    %57 = vector.broadcast %56 : i32 to vector<1x256xi32>
    %58 = arith.cmpi slt, %8, %57 : vector<1x256xi32>
    %59 = arith.andi %55, %58 : vector<1x256xi1>
    %60 = vector.shape_cast %59 : vector<1x256xi1> to vector<1x256xi1>
    %61 = vector.broadcast %60 : vector<1x256xi1> to vector<3x256xi1>
    %62 = vector.shape_cast %29 : vector<1x1xf32> to vector<1x1xf32>
    %63 = vector.broadcast %62 : vector<1x1xf32> to vector<3x256xf32>
    %64 = arith.select %61, %63, %3 : vector<3x256xi1>, vector<3x256xf32>
    %65 = arith.select %46, %64, %3 : vector<3x256xf32>
    %c4_i32_14 = arith.constant 4 : i32
    %66 = arith.addi %0, %c4_i32_14 : i32
    %c0_i32_15 = arith.constant 0 : i32
    %67 = arith.addi %66, %c0_i32_15 : i32
    %68 = arith.index_cast %67 : i32 to index
    %69 = memref.load %arg1[%68] : memref<64xi32, #tpu.memory_space<smem>>
    %c3_i32_16 = arith.constant 3 : i32
    %70 = arith.addi %1, %c3_i32_16 : i32
    %c0_i32_17 = arith.constant 0 : i32
    %71 = arith.addi %70, %c0_i32_17 : i32
    %72 = arith.index_cast %71 : i32 to index
    %73 = memref.load %arg2[%72] : memref<48xf32, #tpu.memory_space<smem>>
    %c3_i32_18 = arith.constant 3 : i32
    %74 = arith.addi %1, %c3_i32_18 : i32
    %c1_i32_19 = arith.constant 1 : i32
    %75 = arith.addi %74, %c1_i32_19 : i32
    %76 = arith.index_cast %75 : i32 to index
    %77 = memref.load %arg2[%76] : memref<48xf32, #tpu.memory_space<smem>>
    %c3_i32_20 = arith.constant 3 : i32
    %78 = arith.addi %1, %c3_i32_20 : i32
    %c2_i32_21 = arith.constant 2 : i32
    %79 = arith.addi %78, %c2_i32_21 : i32
    %80 = arith.index_cast %79 : i32 to index
    %81 = memref.load %arg2[%80] : memref<48xf32, #tpu.memory_space<smem>>
    %c4_i32_22 = arith.constant 4 : i32
    %82 = arith.addi %0, %c4_i32_22 : i32
    %c1_i32_23 = arith.constant 1 : i32
    %83 = arith.addi %82, %c1_i32_23 : i32
    %84 = arith.index_cast %83 : i32 to index
    %85 = memref.load %arg1[%84] : memref<64xi32, #tpu.memory_space<smem>>
    %c4_i32_24 = arith.constant 4 : i32
    %86 = arith.addi %0, %c4_i32_24 : i32
    %c2_i32_25 = arith.constant 2 : i32
    %87 = arith.addi %86, %c2_i32_25 : i32
    %88 = arith.index_cast %87 : i32 to index
    %89 = memref.load %arg1[%88] : memref<64xi32, #tpu.memory_space<smem>>
    %c4_i32_26 = arith.constant 4 : i32
    %90 = arith.addi %0, %c4_i32_26 : i32
    %c3_i32_27 = arith.constant 3 : i32
    %91 = arith.addi %90, %c3_i32_27 : i32
    %92 = arith.index_cast %91 : i32 to index
    %93 = memref.load %arg1[%92] : memref<64xi32, #tpu.memory_space<smem>>
    %cst_28 = arith.constant 1.000000e+00 : f32
    %94 = arith.subf %cst_28, %73 : f32
    %95 = vector.extract_strided_slice %65 {offsets = [0, 0], sizes = [1, 256], strides = [1, 1]} : vector<3x256xf32> to vector<1x256xf32>
    %cst_29 = arith.constant 2.989000e-01 : f32
    %96 = vector.broadcast %cst_29 : f32 to vector<1x256xf32>
    %97 = arith.mulf %96, %95 : vector<1x256xf32>
    %98 = vector.extract_strided_slice %65 {offsets = [1, 0], sizes = [1, 256], strides = [1, 1]} : vector<3x256xf32> to vector<1x256xf32>
    %cst_30 = arith.constant 5.870000e-01 : f32
    %99 = vector.broadcast %cst_30 : f32 to vector<1x256xf32>
    %100 = arith.mulf %99, %98 : vector<1x256xf32>
    %101 = arith.addf %97, %100 : vector<1x256xf32>
    %102 = vector.extract_strided_slice %65 {offsets = [2, 0], sizes = [1, 256], strides = [1, 1]} : vector<3x256xf32> to vector<1x256xf32>
    %cst_31 = arith.constant 1.140000e-01 : f32
    %103 = vector.broadcast %cst_31 : f32 to vector<1x256xf32>
    %104 = arith.mulf %103, %102 : vector<1x256xf32>
    %105 = arith.addf %101, %104 : vector<1x256xf32>
    %cst_32 = arith.constant dense<0x7F800000> : vector<3xf32>
    %106 = vector.multi_reduction <minimumf>, %65, %cst_32 [1] : vector<3x256xf32> to vector<3xf32>
    %107 = vector.shape_cast %106 : vector<3xf32> to vector<3x1xf32>
    %cst_33 = arith.constant dense<0xFF800000> : vector<3xf32>
    %108 = vector.multi_reduction <maximumf>, %65, %cst_33 [1] : vector<3x256xf32> to vector<3xf32>
    %109 = vector.shape_cast %108 : vector<3xf32> to vector<3x1xf32>
    %110 = arith.cmpf oeq, %107, %109 : vector<3x1xf32>
    %cst_34 = arith.constant 0.000000e+00 : f32
    %111 = vector.broadcast %cst_34 : f32 to vector<3x1xf32>
    %112 = arith.select %110, %111, %107 : vector<3x1xi1>, vector<3x1xf32>
    %113 = arith.subf %109, %107 : vector<3x1xf32>
    %cst_35 = arith.constant 1.000000e+00 : f32
    %114 = vector.broadcast %cst_35 : f32 to vector<3x1xf32>
    %115 = arith.select %110, %114, %113 : vector<3x1xi1>, vector<3x1xf32>
    %cst_36 = arith.constant 9.99999996E-13 : f32
    %116 = vector.broadcast %cst_36 : f32 to vector<3x1xf32>
    %117 = arith.maximumf %115, %116 : vector<3x1xf32>
    %118 = tpu.reciprocal %117 {approx = true} : vector<3x1xf32> -> vector<3x1xf32>
    %119 = vector.broadcast %112 : vector<3x1xf32> to vector<3x256xf32>
    %120 = arith.subf %65, %119 : vector<3x256xf32>
    %121 = vector.broadcast %118 : vector<3x1xf32> to vector<3x256xf32>
    %122 = arith.mulf %120, %121 : vector<3x256xf32>
    %cst_37 = arith.constant 0.000000e+00 : f32
    %cst_38 = arith.constant 1.000000e+00 : f32
    %123 = vector.broadcast %cst_37 : f32 to vector<3x256xf32>
    %124 = arith.maximumf %123, %122 : vector<3x256xf32>
    %125 = vector.broadcast %cst_38 : f32 to vector<3x256xf32>
    %126 = arith.minimumf %125, %124 : vector<3x256xf32>
    %127 = vector.broadcast %73 : f32 to vector<3x256xf32>
    %128 = arith.mulf %126, %127 : vector<3x256xf32>
    %129 = vector.broadcast %94 : f32 to vector<3x256xf32>
    %130 = arith.mulf %65, %129 : vector<3x256xf32>
    %131 = arith.addf %128, %130 : vector<3x256xf32>
    %132 = vector.broadcast %73 : f32 to vector<3x256xf32>
    %133 = arith.mulf %65, %132 : vector<3x256xf32>
    %cst_39 = arith.constant 0.000000e+00 : f32
    %cst_40 = arith.constant 1.000000e+00 : f32
    %134 = vector.broadcast %cst_39 : f32 to vector<3x256xf32>
    %135 = arith.maximumf %134, %133 : vector<3x256xf32>
    %136 = vector.broadcast %cst_40 : f32 to vector<3x256xf32>
    %137 = arith.minimumf %136, %135 : vector<3x256xf32>
    %138 = vector.broadcast %73 : f32 to vector<3x256xf32>
    %139 = arith.mulf %138, %65 : vector<3x256xf32>
    %140 = vector.broadcast %94 : f32 to vector<1x256xf32>
    %141 = arith.mulf %140, %105 : vector<1x256xf32>
    %142 = vector.broadcast %141 : vector<1x256xf32> to vector<3x256xf32>
    %143 = arith.addf %139, %142 : vector<3x256xf32>
    %cst_41 = arith.constant 0.000000e+00 : f32
    %cst_42 = arith.constant 1.000000e+00 : f32
    %144 = vector.broadcast %cst_41 : f32 to vector<3x256xf32>
    %145 = arith.maximumf %144, %143 : vector<3x256xf32>
    %146 = vector.broadcast %cst_42 : f32 to vector<3x256xf32>
    %147 = arith.minimumf %146, %145 : vector<3x256xf32>
    %148 = vector.shape_cast %105 : vector<1x256xf32> to vector<1x1x256xf32>
    %cst_43 = arith.constant dense<0.000000e+00> : vector<1xf32>
    %149 = vector.multi_reduction <add>, %148, %cst_43 [1, 2] : vector<1x1x256xf32> to vector<1xf32>
    %150 = vector.shape_cast %149 : vector<1xf32> to vector<1x1x1xf32>
    %151 = vector.extract %150[0, 0, 0] : f32 from vector<1x1x1xf32>
    %152 = vector.broadcast %151 : f32 to vector<1x1xf32>
    %cst_44 = arith.constant 2.560000e+02 : f32
    %153 = vector.broadcast %cst_44 : f32 to vector<1x1xf32>
    %154 = arith.divf %152, %153 : vector<1x1xf32>
    %155 = vector.broadcast %73 : f32 to vector<3x256xf32>
    %156 = arith.mulf %155, %65 : vector<3x256xf32>
    %157 = vector.broadcast %94 : f32 to vector<1x1xf32>
    %158 = arith.mulf %157, %154 : vector<1x1xf32>
    %159 = vector.broadcast %158 : vector<1x1xf32> to vector<3x256xf32>
    %160 = arith.addf %156, %159 : vector<3x256xf32>
    %cst_45 = arith.constant 0.000000e+00 : f32
    %cst_46 = arith.constant 1.000000e+00 : f32
    %161 = vector.broadcast %cst_45 : f32 to vector<3x256xf32>
    %162 = arith.maximumf %161, %160 : vector<3x256xf32>
    %163 = vector.broadcast %cst_46 : f32 to vector<3x256xf32>
    %164 = arith.minimumf %163, %162 : vector<3x256xf32>
    %cst_47 = arith.constant 1.000000e+00 : f32
    %165 = vector.broadcast %cst_47 : f32 to vector<3x256xf32>
    %166 = arith.subf %165, %65 : vector<3x256xf32>
    %167 = vector.broadcast %73 : f32 to vector<3x256xf32>
    %168 = arith.mulf %166, %167 : vector<3x256xf32>
    %169 = vector.broadcast %94 : f32 to vector<3x256xf32>
    %170 = arith.mulf %65, %169 : vector<3x256xf32>
    %171 = arith.addf %168, %170 : vector<3x256xf32>
    %172 = vector.broadcast %73 : f32 to vector<3x256xf32>
    %173 = arith.cmpf oge, %65, %172 : vector<3x256xf32>
    %cst_48 = arith.constant 1.000000e+00 : f32
    %174 = vector.broadcast %cst_48 : f32 to vector<3x256xf32>
    %175 = arith.subf %174, %65 : vector<3x256xf32>
    %176 = arith.select %173, %175, %65 : vector<3x256xi1>, vector<3x256xf32>
    %177 = vector.broadcast %77 : f32 to vector<3x256xf32>
    %178 = arith.mulf %65, %177 : vector<3x256xf32>
    %179 = math.floor %178 : vector<3x256xf32>
    %180 = vector.broadcast %81 : f32 to vector<3x256xf32>
    %181 = arith.mulf %179, %180 : vector<3x256xf32>
    %cst_49 = arith.constant 0.000000e+00 : f32
    %cst_50 = arith.constant 1.000000e+00 : f32
    %182 = vector.broadcast %cst_49 : f32 to vector<3x256xf32>
    %183 = arith.maximumf %182, %181 : vector<3x256xf32>
    %184 = vector.broadcast %cst_50 : f32 to vector<3x256xf32>
    %185 = arith.minimumf %184, %183 : vector<3x256xf32>
    %186 = vector.broadcast %85 : i32 to vector<1x256xi32>
    %187 = arith.cmpi sge, %6, %186 : vector<1x256xi32>
    %188 = arith.addi %85, %93 : i32
    %189 = vector.broadcast %188 : i32 to vector<1x256xi32>
    %190 = arith.cmpi slt, %6, %189 : vector<1x256xi32>
    %191 = arith.andi %187, %190 : vector<1x256xi1>
    %192 = vector.broadcast %89 : i32 to vector<1x256xi32>
    %193 = arith.cmpi sge, %8, %192 : vector<1x256xi32>
    %194 = arith.andi %191, %193 : vector<1x256xi1>
    %195 = arith.addi %89, %93 : i32
    %196 = vector.broadcast %195 : i32 to vector<1x256xi32>
    %197 = arith.cmpi slt, %8, %196 : vector<1x256xi32>
    %198 = arith.andi %194, %197 : vector<1x256xi1>
    %199 = vector.shape_cast %198 : vector<1x256xi1> to vector<1x256xi1>
    %200 = vector.broadcast %199 : vector<1x256xi1> to vector<3x256xi1>
    %201 = vector.shape_cast %29 : vector<1x1xf32> to vector<1x1xf32>
    %202 = vector.broadcast %201 : vector<1x1xf32> to vector<3x256xf32>
    %203 = arith.select %200, %202, %65 : vector<3x256xi1>, vector<3x256xf32>
    %c1_i32_51 = arith.constant 1 : i32
    %204 = tpu.dynamic_rotate %65 by %c1_i32_51 dim 1 : vector<3x256xf32>, i32 -> vector<3x256xf32>
    %cst_52 = arith.constant 0.000000e+00 : f32
    %205 = vector.shape_cast %10 : vector<1x256xi1> to vector<1x256xi1>
    %206 = vector.broadcast %205 : vector<1x256xi1> to vector<3x256xi1>
    %207 = vector.broadcast %cst_52 : f32 to vector<3x256xf32>
    %208 = arith.select %206, %204, %207 : vector<3x256xi1>, vector<3x256xf32>
    %c255_i32 = arith.constant 255 : i32
    %209 = tpu.dynamic_rotate %65 by %c255_i32 dim 1 : vector<3x256xf32>, i32 -> vector<3x256xf32>
    %cst_53 = arith.constant 0.000000e+00 : f32
    %210 = vector.shape_cast %12 : vector<1x256xi1> to vector<1x256xi1>
    %211 = vector.broadcast %210 : vector<1x256xi1> to vector<3x256xi1>
    %212 = vector.broadcast %cst_53 : f32 to vector<3x256xf32>
    %213 = arith.select %211, %209, %212 : vector<3x256xi1>, vector<3x256xf32>
    %214 = arith.addf %65, %208 : vector<3x256xf32>
    %215 = arith.addf %214, %213 : vector<3x256xf32>
    %c16_i32 = arith.constant 16 : i32
    %216 = tpu.dynamic_rotate %215 by %c16_i32 dim 1 : vector<3x256xf32>, i32 -> vector<3x256xf32>
    %cst_54 = arith.constant 0.000000e+00 : f32
    %217 = vector.shape_cast %14 : vector<1x256xi1> to vector<1x256xi1>
    %218 = vector.broadcast %217 : vector<1x256xi1> to vector<3x256xi1>
    %219 = vector.broadcast %cst_54 : f32 to vector<3x256xf32>
    %220 = arith.select %218, %216, %219 : vector<3x256xi1>, vector<3x256xf32>
    %c240_i32 = arith.constant 240 : i32
    %221 = tpu.dynamic_rotate %215 by %c240_i32 dim 1 : vector<3x256xf32>, i32 -> vector<3x256xf32>
    %cst_55 = arith.constant 0.000000e+00 : f32
    %222 = vector.shape_cast %16 : vector<1x256xi1> to vector<1x256xi1>
    %223 = vector.broadcast %222 : vector<1x256xi1> to vector<3x256xi1>
    %224 = vector.broadcast %cst_55 : f32 to vector<3x256xf32>
    %225 = arith.select %223, %221, %224 : vector<3x256xi1>, vector<3x256xf32>
    %226 = arith.addf %215, %220 : vector<3x256xf32>
    %227 = arith.addf %226, %225 : vector<3x256xf32>
    %cst_56 = arith.constant 4.000000e+00 : f32
    %228 = vector.broadcast %cst_56 : f32 to vector<3x256xf32>
    %229 = arith.mulf %228, %65 : vector<3x256xf32>
    %230 = arith.addf %227, %229 : vector<3x256xf32>
    %cst_57 = arith.constant 0.0769230798 : f32
    %231 = vector.broadcast %cst_57 : f32 to vector<3x256xf32>
    %232 = arith.mulf %230, %231 : vector<3x256xf32>
    %cst_58 = arith.constant 0.000000e+00 : f32
    %cst_59 = arith.constant 1.000000e+00 : f32
    %233 = vector.broadcast %cst_58 : f32 to vector<3x256xf32>
    %234 = arith.maximumf %233, %232 : vector<3x256xf32>
    %235 = vector.broadcast %cst_59 : f32 to vector<3x256xf32>
    %236 = arith.minimumf %235, %234 : vector<3x256xf32>
    %237 = vector.broadcast %73 : f32 to vector<3x256xf32>
    %238 = arith.mulf %236, %237 : vector<3x256xf32>
    %239 = vector.broadcast %94 : f32 to vector<3x256xf32>
    %240 = arith.mulf %65, %239 : vector<3x256xf32>
    %241 = arith.addf %238, %240 : vector<3x256xf32>
    %242 = vector.broadcast %73 : f32 to vector<3x256xf32>
    %243 = arith.mulf %242, %65 : vector<3x256xf32>
    %244 = vector.shape_cast %19 : vector<1x256xi1> to vector<1x256xi1>
    %245 = vector.broadcast %244 : vector<1x256xi1> to vector<3x256xi1>
    %246 = arith.select %245, %236, %65 : vector<3x256xi1>, vector<3x256xf32>
    %247 = vector.broadcast %94 : f32 to vector<3x256xf32>
    %248 = arith.mulf %247, %246 : vector<3x256xf32>
    %249 = arith.addf %243, %248 : vector<3x256xf32>
    %cst_60 = arith.constant 0.000000e+00 : f32
    %cst_61 = arith.constant 1.000000e+00 : f32
    %250 = vector.broadcast %cst_60 : f32 to vector<3x256xf32>
    %251 = arith.maximumf %250, %249 : vector<3x256xf32>
    %252 = vector.broadcast %cst_61 : f32 to vector<3x256xf32>
    %253 = arith.minimumf %252, %251 : vector<3x256xf32>
    %c0_i32_62 = arith.constant 0 : i32
    %254 = arith.cmpi eq, %69, %c0_i32_62 : i32
    %255 = arith.select %254, %131, %65 : vector<3x256xf32>
    %c1_i32_63 = arith.constant 1 : i32
    %256 = arith.cmpi eq, %69, %c1_i32_63 : i32
    %257 = arith.select %256, %137, %255 : vector<3x256xf32>
    %c2_i32_64 = arith.constant 2 : i32
    %258 = arith.cmpi eq, %69, %c2_i32_64 : i32
    %259 = arith.select %258, %147, %257 : vector<3x256xf32>
    %c3_i32_65 = arith.constant 3 : i32
    %260 = arith.cmpi eq, %69, %c3_i32_65 : i32
    %261 = arith.select %260, %164, %259 : vector<3x256xf32>
    %c4_i32_66 = arith.constant 4 : i32
    %262 = arith.cmpi eq, %69, %c4_i32_66 : i32
    %263 = arith.select %262, %203, %261 : vector<3x256xf32>
    %c6_i32_67 = arith.constant 6 : i32
    %264 = arith.cmpi eq, %69, %c6_i32_67 : i32
    %265 = arith.select %264, %171, %263 : vector<3x256xf32>
    %c8_i32_68 = arith.constant 8 : i32
    %266 = arith.cmpi eq, %69, %c8_i32_68 : i32
    %267 = arith.select %266, %185, %265 : vector<3x256xf32>
    %c11_i32 = arith.constant 11 : i32
    %268 = arith.cmpi eq, %69, %c11_i32 : i32
    %269 = arith.select %268, %253, %267 : vector<3x256xf32>
    %c14_i32 = arith.constant 14 : i32
    %270 = arith.cmpi eq, %69, %c14_i32 : i32
    %271 = arith.select %270, %241, %269 : vector<3x256xf32>
    %c15_i32_69 = arith.constant 15 : i32
    %272 = arith.cmpi eq, %69, %c15_i32_69 : i32
    %273 = arith.select %272, %176, %271 : vector<3x256xf32>
    %c0_70 = arith.constant 0 : index
    %c0_71 = arith.constant 0 : index
    %c0_72 = arith.constant 0 : index
    %274 = vector.load %arg4[%c0_70, %c0_71, %c0_72] : memref<1x3x256xf32, #tpu.memory_space<vmem>>, vector<1x3x256xf32>
    %275 = vector.shape_cast %274 : vector<1x3x256xf32> to vector<3x256xf32>
    %276 = vector.shape_cast %273 : vector<3x256xf32> to vector<1x3x256xf32>
    tpu.vector_store %arg4[%c0_70, %c0_71, %c0_72], %276 {strides = array<i32>} : memref<1x3x256xf32, #tpu.memory_space<vmem>>, vector<1x3x256xf32>,
    return
  }
  func.func @transform_0(%arg0: i32, %arg1: memref<64xi32, #tpu.memory_space<smem>>) -> i32 {
    %c0_i32 = arith.constant 0 : i32
    %c0_i32_0 = arith.constant 0 : i32
    return %c0_i32 : i32
  }
  func.func @transform_1(%arg0: i32, %arg1: memref<64xi32, #tpu.memory_space<smem>>) -> (i32, i32, i32) {
    %c0_i32 = arith.constant 0 : i32
    %c0_i32_0 = arith.constant 0 : i32
    %c0_i32_1 = arith.constant 0 : i32
    return %arg0, %c0_i32, %c0_i32_0 : i32, i32, i32
  }
  func.func @transform_2(%arg0: i32, %arg1: memref<64xi32, #tpu.memory_space<smem>>) -> (i32, i32, i32) {
    %c0_i32 = arith.constant 0 : i32
    %c0_i32_0 = arith.constant 0 : i32
    %c0_i32_1 = arith.constant 0 : i32
    return %arg0, %c0_i32, %c0_i32_0 : i32, i32, i32
  }
}

</mosaic_0001>

<llo_original>
// kernel: _forward_impl.3
$region0: #{_forward_impl.3}
  #allocation0 [shape = 'u32[]', space=smem, size = 0x4, offset = 0x4, fixed_abs, tag = 'smem constant byte address 0x4 - core index']
  #allocation1 [shape = 'u32[144,128]{1,0:T(1,128)}', space=vmem, size = 0x12000, scoped, tag = 'internal scratch']
  #allocation2 [shape = 's32[1]{0}', space=sflag, size = 0x4, scoped, tag = 'scoped memory for _forward_impl.3']
  #allocation3 [shape = 'u8[512]{0}', space=smem, size = 0x200, scoped, tag = 'prefetched SMEM operand 0']
  %s0 = inlined_call_operand.vmem [shape: s32[64], index: 0, kind: input, shape index: {}]
  %s1 = inlined_call_operand.vmem [shape: f32[48], index: 1, kind: input, shape index: {}]
  %s2 = inlined_call_operand.vmem [shape: f32[8,3,256], index: 2, kind: input, shape index: {}]
  %s3 = inlined_call_operand.vmem [shape: f32[8,3,256], index: 3, kind: output, shape index: {}]
  %s4 = sld [smem:[#allocation0]]
  $region45: #{_forward_impl.3} parent=0
    _
  %s6 = ssub.s32 1, %s4
  %s7 = scalar_select 0, %s6, %s4
  %s8 = sshll.u32 %s0, 4
  %s9 = int_to_ptr.vmem [resolvable:$true] %s8
  %11 = dma.vmem_to_smem %s9, 16, [#allocation3], [#allocation2]
  %12 = dma.done [#allocation2], 16
  %13 = sfence
  $region1: #{_forward_impl.3} parent=0
    #allocation4 [shape = 'u8[512]{0}', space=smem, size = 0x200, scoped, tag = 'input window, operand 1, single buffered']
    #allocation5 [shape = 's32[2]{0}', space=sflag, size = 0x8, scoped, tag = 'scoped memory for _forward_impl.3']
    %14 = vsyncpa [#allocation5], 0
    loop: start=0, step=1, limit=10
    $region2: #{_forward_impl.3} parent=1 // loop_pre_header
      _
    $region3: #{_forward_impl.3} parent=1 // loop_header
      %s16 = sphi 0, %s20
      %p17 = scmp.ge.s32.totalorder %s16, 10
      %s24 = sphi 0, %s24
      %s26 = sphi 0, %s24
      %s27 = sphi 0, %s26
      %s41 = sphi 0, %s27
      %s47 = sphi 0, %s49
      %s50 = sphi 0, %s47
      %s51 = sphi 0, %s50
      %s67 = sphi 0, %s51
      %s73 = sphi 0, %s75
      %s76 = sphi 0, %s73
      %s77 = sphi 0, %s76
      %s93 = sphi 0, %s77
    $region4: #{_forward_impl.3} parent=1 // loop_header_branch
      %19 = sbr.rel (%p17) target = $region8
    $region5: #{_forward_impl.3} parent=1 // loop_body
      %s21 = ssub.s32 %s16, 1
      %s22 = ssub.s32 %s16, 2
      %s23 = sadd.s32 %s16, 1
      %s25 = sadd.s32 %s24, 1
      %p28 = scmp.eq.s32.totalorder %s16, 7
      %p29 = scmp.ne.s32.totalorder %s24, %s26
      %p30 = scmp.eq.s32.totalorder %s16, 0
      %p31 = por %p29, %p30
      %p32 = scmp.ne.s32.totalorder %s24, %s26
      %p33 = scmp.eq.s32.totalorder %s21, 7
      %p34 = por %p32, %p33
      %p35 = scmp.ne.s32.totalorder %s26, %s27
      %p36 = scmp.eq.s32.totalorder %s21, 0
      %p37 = por %p35, %p36
      %p38 = scmp.ne.s32.totalorder %s26, %s27
      %p39 = scmp.eq.s32.totalorder %s22, 7
      %p40 = por %p38, %p39
      %p42 = scmp.ne.s32.totalorder %s27, %s41
      %p43 = scmp.eq.s32.totalorder %s22, 0
      %p44 = por %p42, %p43
      %s45 = ssub.s32 %s16, %s23
      %p46 = scmp.eq.s32.totalorder %s45, 0
      %s48 = sadd.s32 %s47, 1
      %s49 = scalar_select %p46, %s47, %s48
      %p52 = pneg %p46
      %p53 = scmp.eq.s32.totalorder %s16, 7
      %p54 = por %p52, %p53
      %p55 = scmp.ne.s32.totalorder %s47, %s50
      %p56 = scmp.eq.s32.totalorder %s16, 0
      %p57 = por %p55, %p56
      %p58 = scmp.ne.s32.totalorder %s47, %s50
      %p59 = scmp.eq.s32.totalorder %s21, 7
      %p60 = por %p58, %p59
      %p61 = scmp.ne.s32.totalorder %s50, %s51
      %p62 = scmp.eq.s32.totalorder %s21, 0
      %p63 = por %p61, %p62
      %p64 = scmp.ne.s32.totalorder %s50, %s51
      %p65 = scmp.eq.s32.totalorder %s22, 7
      %p66 = por %p64, %p65
      %p68 = scmp.ne.s32.totalorder %s51, %s67
      %p69 = scmp.eq.s32.totalorder %s22, 0
      %p70 = por %p68, %p69
      %s71 = ssub.s32 %s16, %s23
      %p72 = scmp.eq.s32.totalorder %s71, 0
      %s74 = sadd.s32 %s73, 1
      %s75 = scalar_select %p72, %s73, %s74
      %p78 = pneg %p72
      %p79 = scmp.eq.s32.totalorder %s16, 7
      %p80 = por %p78, %p79
      %p81 = scmp.ne.s32.totalorder %s73, %s76
      %p82 = scmp.eq.s32.totalorder %s16, 0
      %p83 = por %p81, %p82
      %p84 = scmp.ne.s32.totalorder %s73, %s76
      %p85 = scmp.eq.s32.totalorder %s21, 7
      %p86 = por %p84, %p85
      %p87 = scmp.ne.s32.totalorder %s76, %s77
      %p88 = scmp.eq.s32.totalorder %s21, 0
      %p89 = por %p87, %p88
      %p90 = scmp.ne.s32.totalorder %s76, %s77
      %p91 = scmp.eq.s32.totalorder %s22, 7
      %p92 = por %p90, %p91
      %p94 = scmp.ne.s32.totalorder %s77, %s93
      %p95 = scmp.eq.s32.totalorder %s22, 0
      %p96 = por %p94, %p95
      %p97 = scmp.le.s32.totalorder 1, %s16
      %p98 = scmp.lt.s32.totalorder %s16, 9
      %p99 = pnand %p97, %p98
      %p100 = pneg %p99
      // Predicated region
      $region9: #{_forward_impl.3} parent=5 // pred_check
        _
      $region10: #{_forward_impl.3} parent=5 // pred_check_branch
        %102 = sbr.rel (%p99) target = $region12
      $region11: #{_forward_impl.3} parent=5 // pred_region
        %s103 = ssub.s32 %s16, 1
        // Predicated region
        $region13: #{_forward_impl.3} parent=11 // pred_check
          %p104 = pneg %p37
        $region14: #{_forward_impl.3} parent=11 // pred_check_branch
          %106 = sbr.rel (%p104) target = $region16
        $region15: #{_forward_impl.3} parent=11 // pred_region
          %s108 = ssub.s32 16, 16
          %109 = vsyncadd [#allocation5], %s108
          %s111 = sshll.u32 %s1, 4
          %s112 = int_to_ptr.vmem [resolvable:$true] %s111
          %114 = dma.vmem_to_smem %s112, 16, [#allocation4], [#allocation5]
        $region16: #{_forward_impl.3} parent=11 // pred_fallthru
          _
      $region12: #{_forward_impl.3} parent=5 // pred_fallthru
        _
      %p115 = scmp.lt.s32.totalorder %s16, 8
      // Predicated region
      $region17: #{_forward_impl.3} parent=5 // pred_check
        %p116 = pneg %p115
      $region18: #{_forward_impl.3} parent=5 // pred_check_branch
        %118 = sbr.rel (%p116) target = $region20
      $region19: #{_forward_impl.3} parent=5 // pred_region
        // Predicated region
        $region21: #{_forward_impl.3} parent=19 // pred_check
          %p119 = pneg %p57
        $region22: #{_forward_impl.3} parent=19 // pred_check_branch
          %121 = sbr.rel (%p119) target = $region24
        $region23: #{_forward_impl.3} parent=19 // pred_region
          %p122 = scmp.lt.s32.totalorder %s16, 7
          %s123 = scalar_select %p122, %s16, 7
          %s124 = smul.addr %s123, 2
          %s125 = smul.addr %s124, 4
          %s126 = scalar_lea.vmem %s2, %s125
        $region24: #{_forward_impl.3} parent=19 // pred_fallthru
          _
      $region20: #{_forward_impl.3} parent=5 // pred_fallthru
        _
      %p127 = scmp.le.s32.totalorder 1, %s16
      %p128 = scmp.lt.s32.totalorder %s16, 9
      %p129 = pnand %p127, %p128
      %p130 = pneg %p129
      // Predicated region
      $region25: #{_forward_impl.3} parent=5 // pred_check
        _
      $region26: #{_forward_impl.3} parent=5 // pred_check_branch
        %132 = sbr.rel (%p129) target = $region28
      $region27: #{_forward_impl.3} parent=5 // pred_region
        %s133 = ssub.s32 %s16, 1
        // Predicated region
        $region29: #{_forward_impl.3} parent=27 // pred_check
          %p134 = pneg %p37
        $region30: #{_forward_impl.3} parent=27 // pred_check_branch
          %136 = sbr.rel (%p134) target = $region32
        $region31: #{_forward_impl.3} parent=27 // pred_region
          %137 = dma.done [#allocation5], 16
        $region32: #{_forward_impl.3} parent=27 // pred_fallthru
          _
        %138 = sfence
        %p139 = pneg %p37
        %p140 = pneg %p34
        %p141 = scmp.lt.s32.totalorder %s21, 7
        %s142 = scalar_select %p141, %s21, 7
        %s143 = smul.addr %s142, 2
        %s144 = smul.addr %s143, 4
        %s145 = scalar_lea.vmem %s2, %s144
        %p146 = pneg %p63
        %p147 = pneg %p60
        %p148 = pneg %p89
        %p149 = pneg %p86
        %p150 = scmp.lt.s32.totalorder %s21, 7
        %s151 = scalar_select %p150, %s21, 7
        %s152 = smul.addr %s151, 2
        %s153 = smul.addr %s152, 4
        %s154 = scalar_lea.vmem %s3, %s153
        %p155 = scmp.lt.s32.totalorder %s21, 7
        %s156 = scalar_select %p155, %s21, 7
        %s157 = smul.addr %s156, 2
        %s158 = smul.addr %s157, 4
        %s159 = scalar_lea.vmem %s2, %s158
        %p160 = scmp.lt.s32.totalorder %s21, 7
        %s161 = scalar_select %p160, %s21, 7
        %s162 = smul.addr %s161, 2
        %s163 = smul.addr %s162, 4
        %s164 = scalar_lea.vmem %s3, %s163
        %s165 = smul.u32 %s21, 8
        %s166 = smul.u32 %s21, 6
        %v167 = vld [vmem:[%s159] sm:$0x77]
        %v168 = vlaneseq
        %v169 = vand.u32 %v168, 127
        %v170 = vadd.s32 %v169, 128
        %v171 = vshra.s32 %v169, 4
        %v172 = vshra.s32 %v170, 4
        %v173 = vand.u32 %v169, 15
        %v174 = vand.u32 %v170, 15
        %vm175 = vcmp.gt.s32.totalorder %v173, 0
        %vm176 = vcmp.gt.s32.totalorder %v174, 0
        %vm177 = vcmp.lt.s32.totalorder %v173, 15
        %vm178 = vcmp.lt.s32.totalorder %v174, 15
        %vm179 = vcmp.gt.s32.totalorder %v171, 0
        %vm180 = vcmp.gt.s32.totalorder %v172, 0
        %vm181 = vcmp.lt.s32.totalorder %v171, 15
        %vm182 = vcmp.lt.s32.totalorder %v172, 15
        %vm183 = vmand %vm179, %vm181
        %vm184 = vmand %vm180, %vm182
        %vm185 = vmand %vm183, %vm175
        %vm186 = vmand %vm184, %vm176
        %vm187 = vmand %vm185, %vm177
        %vm188 = vmand %vm186, %vm178
        %v190 = vcombine.high %v167, %v167
        %vm192 = vcmask 1042432
        %v193 = vsel %vm192, %v167, inf
        %v194 = vsel %vm192, %v190, inf
        %v195 = vmin.f32 %v193, %v194
        %196 = vmin.xlane.f32.xlu0 %v195
        %v197 = vpop.xlane.xlu0 %196
        %v198 = vrot.slane %v197, 4
        %v199 = vmin.f32 %v197, %v198
        %v200 = vrot.slane %v199, 2
        %v201 = vmin.f32 %v199, %v200
        %v202 = vrot.slane %v201, 1
        %v203 = vmin.f32 %v201, %v202
        %s204 = vtos %v203
        %v205 = vstv %s204
        %vm206 = vcmp.ge.f32.partialorder %v205, 0.0
        %v207 = vsel %vm206, 0.5, 0.0
        %s208 = sld [smem:[#allocation3 + %s165]]
        %s209 = sadd.s32 %s165, 1
        %s210 = sld [smem:[#allocation3 + %s209]]
        %s211 = sadd.s32 %s165, 2
        %s212 = sld [smem:[#allocation3 + %s211]]
        %s213 = sadd.s32 %s165, 3
        %s214 = sld [smem:[#allocation3 + %s213]]
        %p215 = scmp.eq.s32.totalorder %s208, 4
        %v216 = vstv %s210
        %vm217 = vcmp.ge.s32.totalorder %v171, %v216
        %vm218 = vcmp.ge.s32.totalorder %v172, %v216
        %s219 = sadd.s32 %s210, %s214
        %v220 = vstv %s219
        %vm221 = vcmp.lt.s32.totalorder %v171, %v220
        %vm222 = vcmp.lt.s32.totalorder %v172, %v220
        %vm223 = vmand %vm217, %vm221
        %vm224 = vmand %vm218, %vm222
        %v225 = vstv %s212
        %vm226 = vcmp.ge.s32.totalorder %v173, %v225
        %vm227 = vcmp.ge.s32.totalorder %v174, %v225
        %vm228 = vmand %vm223, %vm226
        %vm229 = vmand %vm224, %vm227
        %s230 = sadd.s32 %s212, %s214
        %v231 = vstv %s230
        %vm232 = vcmp.lt.s32.totalorder %v173, %v231
        %vm233 = vcmp.lt.s32.totalorder %v174, %v231
        %vm234 = vmand %vm228, %vm232
        %vm235 = vmand %vm229, %vm233
        %v236 = vsel %vm234, 1, 0
        %v237 = vsel %vm235, 1, 0
        %vm238 = vcmp.eq.s32.totalorder %v236, 1
        %vm239 = vcmp.eq.s32.totalorder %v237, 1
        %v240 = vsel %vm238, %v207, %v167
        %v241 = vsel %vm239, %v207, %v190
        %s242 = scalar_select %p215, 1, 0
        %v243 = vstv %s242
        %vm244 = vcmp.eq.s32.totalorder %v243, 1
        %v245 = vsel %vm244, %v240, %v167
        %v246 = vsel %vm244, %v241, %v190
        %s247 = sadd.s32 %s165, 4
        %s248 = sld [smem:[#allocation3 + %s247]]
        %s249 = sadd.s32 %s166, 3
        %s250 = sld [smem:[#allocation4 + %s249]]
        %s251 = sadd.s32 %s166, 4
        %s252 = sld [smem:[#allocation4 + %s251]]
        %s253 = sadd.s32 %s166, 5
        %s254 = sld [smem:[#allocation4 + %s253]]
        %s255 = sadd.s32 %s165, 5
        %s256 = sld [smem:[#allocation3 + %s255]]
        %s257 = sadd.s32 %s165, 6
        %s258 = sld [smem:[#allocation3 + %s257]]
        %s259 = sadd.s32 %s165, 7
        %s260 = sld [smem:[#allocation3 + %s259]]
        %s261 = ssub.f32 1.0, %s250
        %v262 = vmul.f32 %v245, 0.2989
        %v263 = vmul.f32 %v246, 0.2989
        %v264 = vmul.f32 %v245, 0.587
        %v265 = vmul.f32 %v246, 0.587
        %v268 = vrot.slane %v264, 1
        %v269 = vrot.slane %v265, 1
        %v272 = vadd.f32 %v262, %v268
        %v273 = vadd.f32 %v263, %v269
        %v274 = vmul.f32 %v245, 0.114
        %v275 = vmul.f32 %v246, 0.114
        %v278 = vrot.slane %v274, 2
        %v279 = vrot.slane %v275, 2
        %v282 = vadd.f32 %v272, %v278
        %v283 = vadd.f32 %v273, %v279
        %v284 = vsel %vm192, %v245, inf
        %v285 = vsel %vm192, %v246, inf
        %v286 = vmin.f32 %v284, %v285
        %287 = vmin.xlane.f32.xlu0 %v286
        %v288 = vpop.xlane.xlu0 %287
        %v289 = vsel %vm192, %v245, -inf
        %v290 = vsel %vm192, %v246, -inf
        %v291 = vmax.f32 %v289, %v290
        %292 = vmax.xlane.f32.xlu0 %v291
        %v293 = vpop.xlane.xlu0 %292
        %vm294 = vcmp.eq.f32.partialorder %v288, %v293
        %v295 = vsel %vm294, 0.0, %v288
        %v296 = vsub.f32 %v293, %v288
        %v297 = vsel %vm294, 1.0, %v296
        %v298 = vmax.f32 %v297, 1e-12
        %v299 = vrcp.pop %v298
        %v300 = vsub.f32 %v245, %v295
        %v301 = vsub.f32 %v246, %v295
        %v302 = vmul.f32 %v300, %v299
        %v303 = vmul.f32 %v301, %v299
        %v304 = vmax.f32 %v302, 0.0
        %v305 = vmax.f32 %v303, 0.0
        %v306 = vmin.f32 %v304, 1.0
        %v307 = vmin.f32 %v305, 1.0
        %v308 = vstv %s250
        %v309 = vmul.f32 %v306, %v308
        %v310 = vmul.f32 %v307, %v308
        %v311 = vstv %s261
        %v312 = vmul.f32 %v245, %v311
        %v313 = vmul.f32 %v246, %v311
        %v314 = vadd.f32 %v309, %v312
        %v315 = vadd.f32 %v310, %v313
        %v316 = vmul.f32 %v245, %v308
        %v317 = vmul.f32 %v246, %v308
        %v318 = vmax.f32 %v316, 0.0
        %v319 = vmax.f32 %v317, 0.0
        %v320 = vmin.f32 %v318, 1.0
        %v321 = vmin.f32 %v319, 1.0
        %v322 = vmul.f32 %v311, %v282
        %v323 = vmul.f32 %v311, %v283
        %v324 = vlaneseq
        %v325 = vshrl.u32 %v324, 7
        %v326 = vsub.s32 0, %v325
        %v327 = vrot.slane %v322, %v326
        %v328 = vlaneseq
        %v329 = vshrl.u32 %v328, 7
        %v330 = vsub.s32 0, %v329
        %v331 = vrot.slane %v323, %v330
        %v332 = vadd.f32 %v316, %v327
        %v333 = vadd.f32 %v317, %v331
        %v334 = vmax.f32 %v332, 0.0
        %v335 = vmax.f32 %v333, 0.0
        %v336 = vmin.f32 %v334, 1.0
        %v337 = vmin.f32 %v335, 1.0
        %vm338 = vcmask 1040384
        %v339 = vsel %vm338, %v282, 0.0
        %v340 = vsel %vm338, %v283, 0.0
        %v341 = vadd.f32 %v339, %v340
        %342 = vadd.xlane.f32.xlu0 %v341
        %v343 = vpop.xlane.xlu0 %342
        %v344 = vrot.slane %v343, 4
        %v345 = vadd.f32 %v343, %v344
        %v346 = vrot.slane %v345, 2
        %v347 = vadd.f32 %v345, %v346
        %v348 = vrot.slane %v347, 1
        %v349 = vadd.f32 %v347, %v348
        %s350 = vtos %v349
        %v351 = vstv %s350
        %v352 = vrcp.pop 256.0
        %v353 = vmul.f32 %v351, %v352
        %v354 = vmul.f32 %v311, %v353
        %v355 = vadd.f32 %v316, %v354
        %v356 = vadd.f32 %v317, %v354
        %v357 = vmax.f32 %v355, 0.0
        %v358 = vmax.f32 %v356, 0.0
        %v359 = vmin.f32 %v357, 1.0
        %v360 = vmin.f32 %v358, 1.0
        %v361 = vsub.f32 1.0, %v245
        %v362 = vsub.f32 1.0, %v246
        %v363 = vmul.f32 %v361, %v308
        %v364 = vmul.f32 %v362, %v308
        %v365 = vadd.f32 %v363, %v312
        %v366 = vadd.f32 %v364, %v313
        %vm367 = vcmp.ge.f32.partialorder %v245, %v308
        %vm368 = vcmp.ge.f32.partialorder %v246, %v308
        %v369 = vsel %vm367, %v361, %v245
        %v370 = vsel %vm368, %v362, %v246
        %v371 = vstv %s252
        %v372 = vmul.f32 %v245, %v371
        %v373 = vmul.f32 %v246, %v371
        %v374 = vfloor.f32 %v372
        %v375 = vfloor.f32 %v373
        %v376 = vstv %s254
        %v377 = vmul.f32 %v374, %v376
        %v378 = vmul.f32 %v375, %v376
        %v379 = vmax.f32 %v377, 0.0
        %v380 = vmax.f32 %v378, 0.0
        %v381 = vmin.f32 %v379, 1.0
        %v382 = vmin.f32 %v380, 1.0
        %v383 = vstv %s256
        %vm384 = vcmp.ge.s32.totalorder %v171, %v383
        %vm385 = vcmp.ge.s32.totalorder %v172, %v383
        %s386 = sadd.s32 %s256, %s260
        %v387 = vstv %s386
        %vm388 = vcmp.lt.s32.totalorder %v171, %v387
        %vm389 = vcmp.lt.s32.totalorder %v172, %v387
        %vm390 = vmand %vm384, %vm388
        %vm391 = vmand %vm385, %vm389
        %v392 = vstv %s258
        %vm393 = vcmp.ge.s32.totalorder %v173, %v392
        %vm394 = vcmp.ge.s32.totalorder %v174, %v392
        %vm395 = vmand %vm390, %vm393
        %vm396 = vmand %vm391, %vm394
        %s397 = sadd.s32 %s258, %s260
        %v398 = vstv %s397
        %vm399 = vcmp.lt.s32.totalorder %v173, %v398
        %vm400 = vcmp.lt.s32.totalorder %v174, %v398
        %vm401 = vmand %vm395, %vm399
        %vm402 = vmand %vm396, %vm400
        %v403 = vsel %vm401, 1, 0
        %v404 = vsel %vm402, 1, 0
        %vm405 = vcmp.eq.s32.totalorder %v403, 1
        %vm406 = vcmp.eq.s32.totalorder %v404, 1
        %v407 = vsel %vm405, %v207, %v245
        %v408 = vsel %vm406, %v207, %v246
        %409 = vrot.lane.b32.xlu0 %v245, 1
        %v410 = vpop.permute.xlu0 %409
        %411 = vrot.lane.b32.xlu0 %v246, 1
        %v412 = vpop.permute.xlu0 %411
        %vm413 = vcmp.lt.s32.totalorder %v169, 1
        %v414 = vsel %vm413, %v410, %v412
        %v415 = vsel %vm413, %v412, %v410
        %v416 = vsel %vm175, 1, 0
        %v417 = vsel %vm176, 1, 0
        %vm418 = vcmp.eq.s32.totalorder %v416, 1
        %vm419 = vcmp.eq.s32.totalorder %v417, 1
        %v420 = vsel %vm418, %v415, 0.0
        %v421 = vsel %vm419, %v414, 0.0
        %422 = vrot.lane.b32.xlu0 %v245, 127
        %v423 = vpop.permute.xlu0 %422
        %424 = vrot.lane.b32.xlu0 %v246, 127
        %v425 = vpop.permute.xlu0 %424
        %vm426 = vcmp.lt.s32.totalorder %v169, 127
        %v427 = vsel %vm426, %v423, %v425
        %v428 = vsel %vm426, %v425, %v423
        %v429 = vsel %vm177, 1, 0
        %v430 = vsel %vm178, 1, 0
        %vm431 = vcmp.eq.s32.totalorder %v429, 1
        %vm432 = vcmp.eq.s32.totalorder %v430, 1
        %v433 = vsel %vm431, %v427, 0.0
        %v434 = vsel %vm432, %v428, 0.0
        %v435 = vadd.f32 %v245, %v420
        %v436 = vadd.f32 %v246, %v421
        %v437 = vadd.f32 %v435, %v433
        %v438 = vadd.f32 %v436, %v434
        %439 = vrot.lane.b32.xlu0 %v437, 16
        %v440 = vpop.permute.xlu0 %439
        %441 = vrot.lane.b32.xlu0 %v438, 16
        %v442 = vpop.permute.xlu0 %441
        %vm443 = vcmp.lt.s32.totalorder %v169, 16
        %v444 = vsel %vm443, %v440, %v442
        %v445 = vsel %vm443, %v442, %v440
        %v446 = vsel %vm179, 1, 0
        %v447 = vsel %vm180, 1, 0
        %vm448 = vcmp.eq.s32.totalorder %v446, 1
        %vm449 = vcmp.eq.s32.totalorder %v447, 1
        %v450 = vsel %vm448, %v445, 0.0
        %v451 = vsel %vm449, %v444, 0.0
        %452 = vrot.lane.b32.xlu0 %v437, 112
        %v453 = vpop.permute.xlu0 %452
        %454 = vrot.lane.b32.xlu0 %v438, 112
        %v455 = vpop.permute.xlu0 %454
        %vm456 = vcmp.lt.s32.totalorder %v169, 112
        %v457 = vsel %vm456, %v453, %v455
        %v458 = vsel %vm456, %v455, %v453
        %v459 = vsel %vm181, 1, 0
        %v460 = vsel %vm182, 1, 0
        %vm461 = vcmp.eq.s32.totalorder %v459, 1
        %vm462 = vcmp.eq.s32.totalorder %v460, 1
        %v463 = vsel %vm461, %v457, 0.0
        %v464 = vsel %vm462, %v458, 0.0
        %v465 = vadd.f32 %v437, %v450
        %v466 = vadd.f32 %v438, %v451
        %v467 = vadd.f32 %v465, %v463
        %v468 = vadd.f32 %v466, %v464
        %v469 = vmul.f32 %v245, 4.0
        %v470 = vmul.f32 %v246, 4.0
        %v471 = vadd.f32 %v467, %v469
        %v472 = vadd.f32 %v468, %v470
        %v473 = vmul.f32 %v471, 0.07692308
        %v474 = vmul.f32 %v472, 0.07692308
        %v475 = vmax.f32 %v473, 0.0
        %v476 = vmax.f32 %v474, 0.0
        %v477 = vmin.f32 %v475, 1.0
        %v478 = vmin.f32 %v476, 1.0
        %v479 = vmul.f32 %v477, %v308
        %v480 = vmul.f32 %v478, %v308
        %v481 = vadd.f32 %v479, %v312
        %v482 = vadd.f32 %v480, %v313
        %v483 = vsel %vm187, 1, 0
        %v484 = vsel %vm188, 1, 0
        %vm485 = vcmp.eq.s32.totalorder %v483, 1
        %vm486 = vcmp.eq.s32.totalorder %v484, 1
        %v487 = vsel %vm485, %v477, %v245
        %v488 = vsel %vm486, %v478, %v246
        %v489 = vmul.f32 %v311, %v487
        %v490 = vmul.f32 %v311, %v488
        %v491 = vadd.f32 %v316, %v489
        %v492 = vadd.f32 %v317, %v490
        %v493 = vmax.f32 %v491, 0.0
        %v494 = vmax.f32 %v492, 0.0
        %v495 = vmin.f32 %v493, 1.0
        %v496 = vmin.f32 %v494, 1.0
        %p497 = scmp.eq.s32.totalorder %s248, 0
        %s498 = scalar_select %p497, 1, 0
        %v499 = vstv %s498
        %vm500 = vcmp.eq.s32.totalorder %v499, 1
        %v501 = vsel %vm500, %v314, %v245
        %v502 = vsel %vm500, %v315, %v246
        %p503 = scmp.eq.s32.totalorder %s248, 1
        %s504 = scalar_select %p503, 1, 0
        %v505 = vstv %s504
        %vm506 = vcmp.eq.s32.totalorder %v505, 1
        %v507 = vsel %vm506, %v320, %v501
        %v508 = vsel %vm506, %v321, %v502
        %p509 = scmp.eq.s32.totalorder %s248, 2
        %s510 = scalar_select %p509, 1, 0
        %v511 = vstv %s510
        %vm512 = vcmp.eq.s32.totalorder %v511, 1
        %v513 = vsel %vm512, %v336, %v507
        %v514 = vsel %vm512, %v337, %v508
        %p515 = scmp.eq.s32.totalorder %s248, 3
        %s516 = scalar_select %p515, 1, 0
        %v517 = vstv %s516
        %vm518 = vcmp.eq.s32.totalorder %v517, 1
        %v519 = vsel %vm518, %v359, %v513
        %v520 = vsel %vm518, %v360, %v514
        %p521 = scmp.eq.s32.totalorder %s248, 4
        %s522 = scalar_select %p521, 1, 0
        %v523 = vstv %s522
        %vm524 = vcmp.eq.s32.totalorder %v523, 1
        %v525 = vsel %vm524, %v407, %v519
        %v526 = vsel %vm524, %v408, %v520
        %p527 = scmp.eq.s32.totalorder %s248, 6
        %s528 = scalar_select %p527, 1, 0
        %v529 = vstv %s528
        %vm530 = vcmp.eq.s32.totalorder %v529, 1
        %v531 = vsel %vm530, %v365, %v525
        %v532 = vsel %vm530, %v366, %v526
        %p533 = scmp.eq.s32.totalorder %s248, 8
        %s534 = scalar_select %p533, 1, 0
        %v535 = vstv %s534
        %vm536 = vcmp.eq.s32.totalorder %v535, 1
        %v537 = vsel %vm536, %v381, %v531
        %v538 = vsel %vm536, %v382, %v532
        %p539 = scmp.eq.s32.totalorder %s248, 11
        %s540 = scalar_select %p539, 1, 0
        %v541 = vstv %s540
        %vm542 = vcmp.eq.s32.totalorder %v541, 1
        %v543 = vsel %vm542, %v495, %v537
        %v544 = vsel %vm542, %v496, %v538
        %p545 = scmp.eq.s32.totalorder %s248, 14
        %s546 = scalar_select %p545, 1, 0
        %v547 = vstv %s546
        %vm548 = vcmp.eq.s32.totalorder %v547, 1
        %v549 = vsel %vm548, %v481, %v543
        %v550 = vsel %vm548, %v482, %v544
        %p551 = scmp.eq.s32.totalorder %s248, 15
        %s552 = scalar_select %p551, 1, 0
        %v553 = vstv %s552
        %vm554 = vcmp.eq.s32.totalorder %v553, 1
        %v555 = vsel %vm554, %v369, %v549
        %v556 = vsel %vm554, %v370, %v550
        %v559 = vcombine.low %v555, %v556
        %561 = vst [vmem:[%s164] sm:$0x77] %v559
        %p562 = scmp.lt.s32.totalorder %s21, 7
        %s563 = scalar_select %p562, %s21, 7
        %s564 = smul.addr %s563, 2
        %s565 = smul.addr %s564, 4
        %s566 = scalar_lea.vmem %s3, %s565
        // Predicated region
        $region33: #{_forward_impl.3} parent=27 // pred_check
          %p567 = pneg %p86
        $region34: #{_forward_impl.3} parent=27 // pred_check_branch
          %569 = sbr.rel (%p567) target = $region36
        $region35: #{_forward_impl.3} parent=27 // pred_region
          _
        $region36: #{_forward_impl.3} parent=27 // pred_fallthru
          _
      $region28: #{_forward_impl.3} parent=5 // pred_fallthru
        _
      %p570 = scmp.le.s32.totalorder 2, %s16
      // Predicated region
      $region37: #{_forward_impl.3} parent=5 // pred_check
        %p571 = pneg %p570
      $region38: #{_forward_impl.3} parent=5 // pred_check_branch
        %573 = sbr.rel (%p571) target = $region40
      $region39: #{_forward_impl.3} parent=5 // pred_region
        %s574 = ssub.s32 %s16, 2
        // Predicated region
        $region41: #{_forward_impl.3} parent=39 // pred_check
          %p575 = pneg %p92
        $region42: #{_forward_impl.3} parent=39 // pred_check_branch
          %577 = sbr.rel (%p575) target = $region44
        $region43: #{_forward_impl.3} parent=39 // pred_region
          %p578 = scmp.lt.s32.totalorder %s22, 7
          %s579 = scalar_select %p578, %s22, 7
          %s580 = smul.addr %s579, 2
          %s581 = smul.addr %s580, 4
          %s582 = scalar_lea.vmem %s3, %s581
        $region44: #{_forward_impl.3} parent=39 // pred_fallthru
          _
      $region40: #{_forward_impl.3} parent=5 // pred_fallthru
        _
    $region6: #{_forward_impl.3} parent=1 // loop_footer
      %s20 = sadd.s32 1, %s16
    $region7: #{_forward_impl.3} parent=1 // loop_footer_branch
      %15 = sbr.rel target = $region3
    $region8: #{_forward_impl.3} parent=1 // loop_exit
      _
    %583 = vsyncpa [#allocation5], 1
    %s584 = scalar_lea.sflag [#allocation5], 1
    %585 = vsyncpa %s584, 1

</llo_original>
